<compile_context>
chip_gen: v7x
topology: tpu7x:2x2x1
jax: 0.10.0
libtpu: 0.0.40
codegen_flags: <defaults>
</compile_context>

<pallas_src>
import jax
import jax.numpy as jnp
from jax.experimental import pallas as pl
from jax.experimental.pallas import tpu as pltpu


def se_kernel(x_ref, w1_ref, b1_ref, w2_ref, b2_ref, o_ref):
    # x_ref block: (Bt, C, HW)   (HW on the lane axis)
    # w1: (C, hidden), b1: (1, hidden), w2: (hidden, C), b2: (1, C)
    # o_ref block: (Bt, C, HW)

    # squeeze: global average pool over spatial positions (lane reduction),
    # accumulated in f32 regardless of input dtype.
    m = jnp.mean(x_ref[...].astype(jnp.float32), axis=-1)          # (Bt, C)

    # excitation MLP, batched over the Bt pooled rows, all in f32.
    h = jnp.dot(m, w1_ref[...], preferred_element_type=jnp.float32) + b1_ref[...]
    h = jnp.maximum(h, 0.0)                                          # (Bt, hidden)
    a = jnp.dot(h, w2_ref[...], preferred_element_type=jnp.float32) + b2_ref[...]
    a = jax.nn.sigmoid(a)                                            # (Bt, C)

    # fusion == 'scale': re-read x_ref (no live f32 copy of the whole tile)
    # and multiply in the streaming dtype; attention broadcasts over lanes.
    scale = a.astype(x_ref.dtype)[:, :, None]                        # (Bt, C, 1)
    o_ref[...] = x_ref[...] * scale


def _pick_batch_tile(B, per_batch_bytes, target_bytes=2 << 20):
    """Largest divisor of B whose block stays under ~target_bytes while
    keeping at least 2 grid steps (megacore on v7x)."""
    cap = max(1, target_bytes // max(per_batch_bytes, 1))
    best = 1
    for bt in range(1, B + 1):
        if B % bt != 0 or bt > cap:
            continue
        if (B // bt >= 2) or (B == 1 and bt == 1):
            best = bt
    return best


def se_module(x_nchw, w1, b1, w2, b2):
    """x_nchw: (B, C, H, W); w1: (hidden, C); b1: (hidden,);
    w2: (C, hidden); b2: (C,).  Returns (B, C, H, W)."""
    B, C, H, W = x_nchw.shape
    hidden = w1.shape[0]
    HW = H * W

    # Free reshape (row-major NCHW flattens directly); NO transpose.
    x = x_nchw.reshape(B, C, HW)

    w1_t = jnp.transpose(w1)            # (C, hidden)  -> y = m @ W1^T
    w2_t = jnp.transpose(w2)            # (hidden, C)
    b1_2d = b1.reshape(1, hidden)
    b2_2d = b2.reshape(1, C)

    itemsize = jnp.dtype(x.dtype).itemsize
    per_batch_bytes = C * HW * itemsize
    Bt = _pick_batch_tile(B, per_batch_bytes)
    block_bytes = Bt * per_batch_bytes

    # 2x double-buffered input + 2x output blocks + small weights + slack.
    weight_bytes = (C * hidden * 2 + hidden + C) * 4
    vmem_limit = min(max(4 * block_bytes + weight_bytes + (8 << 20), 16 << 20),
                     64 << 20)
    # TODO(synk): for very large C*H*W (block > ~14 MiB) tile HW as a second
    # grid axis instead of relying on a single whole-feature-map block.

    out = pl.pallas_call(
        se_kernel,
        out_shape=jax.ShapeDtypeStruct((B, C, HW), x.dtype),
        grid_spec=pltpu.PrefetchScalarGridSpec(
            num_scalar_prefetch=0,
            grid=(B // Bt,),
            in_specs=[
                pl.BlockSpec((Bt, C, HW), lambda b: (b, 0, 0)),
                pl.BlockSpec((C, hidden), lambda b: (0, 0)),
                pl.BlockSpec((1, hidden), lambda b: (0, 0)),
                pl.BlockSpec((hidden, C), lambda b: (0, 0)),
                pl.BlockSpec((1, C), lambda b: (0, 0)),
            ],
            out_specs=pl.BlockSpec((Bt, C, HW), lambda b: (b, 0, 0)),
        ),
        compiler_params=pltpu.CompilerParams(
            dimension_semantics=("parallel",),
            vmem_limit_bytes=int(vmem_limit),
        ),
    )(x, w1_t, b1_2d, w2_t, b2_2d)

    # Free reshape back to NCHW.
    return out.reshape(B, C, H, W)


if __name__ == "__main__":
    # SEModule(in_channels=64, r=16) -> hidden_features = 4
    B, C, H, W = 4, 64, 16, 16
    r = 16
    hidden = C // r

    key = jax.random.PRNGKey(0)
    kx, k1, kb1, k2, kb2 = jax.random.split(key, 5)

    x = jax.random.normal(kx, (B, C, H, W), dtype=jnp.float32)
    # nn.Linear(in_channels, hidden): weight (hidden, C), bias (hidden,)
    w1 = jax.random.normal(k1, (hidden, C), dtype=jnp.float32) * 0.1
    b1 = jax.random.normal(kb1, (hidden,), dtype=jnp.float32) * 0.1
    # nn.Linear(hidden, in_channels): weight (C, hidden), bias (C,)
    w2 = jax.random.normal(k2, (C, hidden), dtype=jnp.float32) * 0.1
    b2 = jax.random.normal(kb2, (C,), dtype=jnp.float32) * 0.1

    out = se_module(x, w1, b1, w2, b2)
    out = jax.block_until_ready(out)

    # pure-JAX reference for sanity
    m_ref = jnp.mean(x, axis=(2, 3))                               # (B, C)
    h_ref = jnp.maximum(m_ref @ w1.T + b1, 0.0)                    # (B, hidden)
    a_ref = jax.nn.sigmoid(h_ref @ w2.T + b2)                      # (B, C)
    ref = x * a_ref[:, :, None, None]
    assert out.shape == (B, C, H, W)
    assert jnp.allclose(out, ref, atol=1e-5, rtol=1e-5)

    print("KERNEL_OK")
</pallas_src>

<mosaic_0001>
module attributes {stable_mosaic.version = 11 : i64} {
  func.func @se_kernel(%arg0: i32, %arg1: memref<2x64x256xf32, #tpu.memory_space<vmem>>, %arg2: memref<64x4xf32, #tpu.memory_space<vmem>>, %arg3: memref<1x4xf32, #tpu.memory_space<vmem>>, %arg4: memref<4x64xf32, #tpu.memory_space<vmem>>, %arg5: memref<1x64xf32, #tpu.memory_space<vmem>>, %arg6: memref<2x64x256xf32, #tpu.memory_space<vmem>>) attributes {dimension_semantics = [#tpu.dimension_semantics<parallel>], iteration_bounds = array<i64: 2>, scalar_prefetch = 0 : i64, scratch_operands = 0 : i64, tpu.core_type = #tpu.core_type<tc>, window_params = [{transform_indices = @transform_0, window_bounds = array<i64: 2, 64, 256>}, {pipeline_mode = #tpu.pipeline_mode<synchronous>, transform_indices = @transform_1, window_bounds = array<i64: 64, 4>}, {pipeline_mode = #tpu.pipeline_mode<synchronous>, transform_indices = @transform_2, window_bounds = array<i64: 1, 4>}, {pipeline_mode = #tpu.pipeline_mode<synchronous>, transform_indices = @transform_3, window_bounds = array<i64: 4, 64>}, {pipeline_mode = #tpu.pipeline_mode<synchronous>, transform_indices = @transform_4, window_bounds = array<i64: 1, 64>}, {transform_indices = @transform_5, window_bounds = array<i64: 2, 64, 256>}]} {
    %c0 = arith.constant 0 : index
    %c0_0 = arith.constant 0 : index
    %c0_1 = arith.constant 0 : index
    %0 = vector.load %arg1[%c0, %c0_0, %c0_1] : memref<2x64x256xf32, #tpu.memory_space<vmem>>, vector<2x64x256xf32>
    %cst = arith.constant dense<0.000000e+00> : vector<2x64xf32>
    %1 = vector.multi_reduction <add>, %0, %cst [2] : vector<2x64x256xf32> to vector<2x64xf32>
    %cst_2 = arith.constant 2.560000e+02 : f32
    %2 = vector.broadcast %cst_2 : f32 to vector<2x64xf32>
    %3 = arith.divf %1, %2 : vector<2x64xf32>
    %c0_3 = arith.constant 0 : index
    %c0_4 = arith.constant 0 : index
    %4 = vector.load %arg2[%c0_3, %c0_4] : memref<64x4xf32, #tpu.memory_space<vmem>>, vector<64x4xf32>
    %cst_5 = arith.constant dense<0.000000e+00> : vector<2x4xf32>
    %5 = tpu.matmul %3, %4, %cst_5 {dimension_numbers = #tpu.dot_dimension_numbers<[1], [0], [0], [1], [0, 0, 1, 1], [], []>} : vector<2x64xf32>, vector<64x4xf32>, vector<2x4xf32> -> vector<2x4xf32>
    %c0_6 = arith.constant 0 : index
    %c0_7 = arith.constant 0 : index
    %6 = vector.load %arg3[%c0_6, %c0_7] : memref<1x4xf32, #tpu.memory_space<vmem>>, vector<1x4xf32>
    %7 = vector.broadcast %6 : vector<1x4xf32> to vector<2x4xf32>
    %8 = arith.addf %5, %7 : vector<2x4xf32>
    %cst_8 = arith.constant 0.000000e+00 : f32
    %9 = vector.broadcast %cst_8 : f32 to vector<2x4xf32>
    %10 = arith.maximumf %8, %9 : vector<2x4xf32>
    %c0_9 = arith.constant 0 : index
    %c0_10 = arith.constant 0 : index
    %11 = vector.load %arg4[%c0_9, %c0_10] : memref<4x64xf32, #tpu.memory_space<vmem>>, vector<4x64xf32>
    %cst_11 = arith.constant dense<0.000000e+00> : vector<2x64xf32>
    %12 = tpu.matmul %10, %11, %cst_11 {dimension_numbers = #tpu.dot_dimension_numbers<[1], [0], [0], [1], [0, 0, 1, 1], [], []>} : vector<2x4xf32>, vector<4x64xf32>, vector<2x64xf32> -> vector<2x64xf32>
    %c0_12 = arith.constant 0 : index
    %c0_13 = arith.constant 0 : index
    %13 = vector.load %arg5[%c0_12, %c0_13] : memref<1x64xf32, #tpu.memory_space<vmem>>, vector<1x64xf32>
    %14 = vector.broadcast %13 : vector<1x64xf32> to vector<2x64xf32>
    %15 = arith.addf %12, %14 : vector<2x64xf32>
    %16 = arith.negf %15 : vector<2x64xf32>
    %17 = math.exp %16 : vector<2x64xf32>
    %cst_14 = arith.constant 1.000000e+00 : f32
    %18 = vector.broadcast %cst_14 : f32 to vector<2x64xf32>
    %19 = arith.addf %18, %17 : vector<2x64xf32>
    %20 = arith.divf %18, %19 : vector<2x64xf32>
    %21 = vector.shape_cast %20 : vector<2x64xf32> to vector<2x64x1xf32>
    %c0_15 = arith.constant 0 : index
    %c0_16 = arith.constant 0 : index
    %c0_17 = arith.constant 0 : index
    %22 = vector.load %arg1[%c0_15, %c0_16, %c0_17] : memref<2x64x256xf32, #tpu.memory_space<vmem>>, vector<2x64x256xf32>
    %23 = vector.broadcast %21 : vector<2x64x1xf32> to vector<2x64x256xf32>
    %24 = arith.mulf %22, %23 : vector<2x64x256xf32>
    %c0_18 = arith.constant 0 : index
    %c0_19 = arith.constant 0 : index
    %c0_20 = arith.constant 0 : index
    %25 = vector.load %arg6[%c0_18, %c0_19, %c0_20] : memref<2x64x256xf32, #tpu.memory_space<vmem>>, vector<2x64x256xf32>
    tpu.vector_store %arg6[%c0_18, %c0_19, %c0_20], %24 {strides = array<i32>} : memref<2x64x256xf32, #tpu.memory_space<vmem>>, vector<2x64x256xf32>,
    return
  }
  func.func @transform_0(%arg0: i32) -> (i32, i32, i32) {
    %c0_i32 = arith.constant 0 : i32
    %c0_i32_0 = arith.constant 0 : i32
    %c0_i32_1 = arith.constant 0 : i32
    return %arg0, %c0_i32, %c0_i32_0 : i32, i32, i32
  }
  func.func @transform_1(%arg0: i32) -> (i32, i32) {
    %c0_i32 = arith.constant 0 : i32
    %c0_i32_0 = arith.constant 0 : i32
    %c0_i32_1 = arith.constant 0 : i32
    return %c0_i32, %c0_i32_0 : i32, i32
  }
  func.func @transform_2(%arg0: i32) -> (i32, i32) {
    %c0_i32 = arith.constant 0 : i32
    %c0_i32_0 = arith.constant 0 : i32
    %c0_i32_1 = arith.constant 0 : i32
    return %c0_i32, %c0_i32_0 : i32, i32
  }
  func.func @transform_3(%arg0: i32) -> (i32, i32) {
    %c0_i32 = arith.constant 0 : i32
    %c0_i32_0 = arith.constant 0 : i32
    %c0_i32_1 = arith.constant 0 : i32
    return %c0_i32, %c0_i32_0 : i32, i32
  }
  func.func @transform_4(%arg0: i32) -> (i32, i32) {
    %c0_i32 = arith.constant 0 : i32
    %c0_i32_0 = arith.constant 0 : i32
    %c0_i32_1 = arith.constant 0 : i32
    return %c0_i32, %c0_i32_0 : i32, i32
  }
  func.func @transform_5(%arg0: i32) -> (i32, i32, i32) {
    %c0_i32 = arith.constant 0 : i32
    %c0_i32_0 = arith.constant 0 : i32
    %c0_i32_1 = arith.constant 0 : i32
    return %arg0, %c0_i32, %c0_i32_0 : i32, i32, i32
  }
}

</mosaic_0001>

<llo_original>
// kernel: tpu_custom_call.1
$region0: #{tpu_custom_call.1}
  #allocation0 [shape = 'u32[]', space=smem, size = 0x4, offset = 0x4, fixed_abs, tag = 'smem constant byte address 0x4 - core index']
  #allocation1 [shape = 'u32[144,128]{1,0:T(1,128)}', space=vmem, size = 0x12000, scoped, tag = 'internal scratch']
  %s0 = inlined_call_operand.hbm [shape: f32[4,64,256], index: 0, kind: input, shape index: {}]
  %s1 = inlined_call_operand.vmem [shape: f32[64,4], index: 1, kind: input, shape index: {}]
  %s2 = inlined_call_operand.vmem [shape: f32[1,4], index: 2, kind: input, shape index: {}]
  %s3 = inlined_call_operand.vmem [shape: f32[4,64], index: 3, kind: input, shape index: {}]
  %s4 = inlined_call_operand.vmem [shape: f32[1,64], index: 4, kind: input, shape index: {}]
  %s5 = inlined_call_operand.hbm [shape: f32[4,64,256], index: 5, kind: output, shape index: {}]
  %s6 = sld [smem:[#allocation0]]
  $region57: #{tpu_custom_call.1} parent=0
    _
  %s8 = ssub.s32 1, %s6
  %s9 = scalar_select 0, %s8, %s6
  $region1: #{tpu_custom_call.1} parent=0
    #allocation2 [shape = 'u8[262144]{0}', space=vmem, size = 0x40000, scoped, tag = 'input window, operand 0']
    #allocation3 [shape = 's32[2]{0}', space=sflag, size = 0x8, scoped, tag = 'scoped memory for tpu_custom_call.1']
    #allocation4 [shape = 's32[2]{0}', space=sflag, size = 0x8, scoped, tag = 'scoped memory for tpu_custom_call.1']
    #allocation5 [shape = 'u8[262144]{0}', space=vmem, size = 0x40000, scoped, tag = 'output window, operand 0']
    %10 = vsyncpa [#allocation3], 0
    %s11 = scalar_lea.sflag [#allocation3], 1
    %12 = vsyncpa %s11, 0
    %13 = vsyncpa [#allocation4], 0
    %s14 = scalar_lea.sflag [#allocation4], 1
    %15 = vsyncpa %s14, 0
    loop: start=0, step=1, limit=4
    $region2: #{tpu_custom_call.1} parent=1 // loop_pre_header
      _
    $region3: #{tpu_custom_call.1} parent=1 // loop_header
      %s17 = sphi 0, %s21
      %p18 = scmp.ge.s32.totalorder %s17, 4
      %s27 = sphi 0, %s29
      %s30 = sphi 0, %s27
      %s31 = sphi 0, %s30
      %s47 = sphi 0, %s31
      %s51 = sphi 0, %s51
      %s53 = sphi 0, %s51
      %s54 = sphi 0, %s53
      %s68 = sphi 0, %s54
      %s72 = sphi 0, %s72
      %s74 = sphi 0, %s72
      %s75 = sphi 0, %s74
      %s89 = sphi 0, %s75
      %s93 = sphi 0, %s93
      %s95 = sphi 0, %s93
      %s96 = sphi 0, %s95
      %s110 = sphi 0, %s96
      %s114 = sphi 0, %s114
      %s116 = sphi 0, %s114
      %s117 = sphi 0, %s116
      %s131 = sphi 0, %s117
      %s137 = sphi 0, %s139
      %s140 = sphi 0, %s137
      %s141 = sphi 0, %s140
      %s157 = sphi 0, %s141
    $region4: #{tpu_custom_call.1} parent=1 // loop_header_branch
      %20 = sbr.rel (%p18) target = $region8
    $region5: #{tpu_custom_call.1} parent=1 // loop_body
      %s22 = ssub.s32 %s17, 1
      %s23 = ssub.s32 %s17, 2
      %s24 = sadd.s32 %s17, 1
      %s25 = ssub.s32 %s17, %s24
      %p26 = scmp.eq.s32.totalorder %s25, 0
      %s28 = sadd.s32 %s27, 1
      %s29 = scalar_select %p26, %s27, %s28
      %p32 = pneg %p26
      %p33 = scmp.eq.s32.totalorder %s17, 1
      %p34 = por %p32, %p33
      %p35 = scmp.ne.s32.totalorder %s27, %s30
      %p36 = scmp.eq.s32.totalorder %s17, 0
      %p37 = por %p35, %p36
      %p38 = scmp.ne.s32.totalorder %s27, %s30
      %p39 = scmp.eq.s32.totalorder %s22, 1
      %p40 = por %p38, %p39
      %p41 = scmp.ne.s32.totalorder %s30, %s31
      %p42 = scmp.eq.s32.totalorder %s22, 0
      %p43 = por %p41, %p42
      %p44 = scmp.ne.s32.totalorder %s30, %s31
      %p45 = scmp.eq.s32.totalorder %s23, 1
      %p46 = por %p44, %p45
      %p48 = scmp.ne.s32.totalorder %s31, %s47
      %p49 = scmp.eq.s32.totalorder %s23, 0
      %p50 = por %p48, %p49
      %s52 = sadd.s32 %s51, 1
      %p55 = scmp.eq.s32.totalorder %s17, 1
      %p56 = scmp.ne.s32.totalorder %s51, %s53
      %p57 = scmp.eq.s32.totalorder %s17, 0
      %p58 = por %p56, %p57
      %p59 = scmp.ne.s32.totalorder %s51, %s53
      %p60 = scmp.eq.s32.totalorder %s22, 1
      %p61 = por %p59, %p60
      %p62 = scmp.ne.s32.totalorder %s53, %s54
      %p63 = scmp.eq.s32.totalorder %s22, 0
      %p64 = por %p62, %p63
      %p65 = scmp.ne.s32.totalorder %s53, %s54
      %p66 = scmp.eq.s32.totalorder %s23, 1
      %p67 = por %p65, %p66
      %p69 = scmp.ne.s32.totalorder %s54, %s68
      %p70 = scmp.eq.s32.totalorder %s23, 0
      %p71 = por %p69, %p70
      %s73 = sadd.s32 %s72, 1
      %p76 = scmp.eq.s32.totalorder %s17, 1
      %p77 = scmp.ne.s32.totalorder %s72, %s74
      %p78 = scmp.eq.s32.totalorder %s17, 0
      %p79 = por %p77, %p78
      %p80 = scmp.ne.s32.totalorder %s72, %s74
      %p81 = scmp.eq.s32.totalorder %s22, 1
      %p82 = por %p80, %p81
      %p83 = scmp.ne.s32.totalorder %s74, %s75
      %p84 = scmp.eq.s32.totalorder %s22, 0
      %p85 = por %p83, %p84
      %p86 = scmp.ne.s32.totalorder %s74, %s75
      %p87 = scmp.eq.s32.totalorder %s23, 1
      %p88 = por %p86, %p87
      %p90 = scmp.ne.s32.totalorder %s75, %s89
      %p91 = scmp.eq.s32.totalorder %s23, 0
      %p92 = por %p90, %p91
      %s94 = sadd.s32 %s93, 1
      %p97 = scmp.eq.s32.totalorder %s17, 1
      %p98 = scmp.ne.s32.totalorder %s93, %s95
      %p99 = scmp.eq.s32.totalorder %s17, 0
      %p100 = por %p98, %p99
      %p101 = scmp.ne.s32.totalorder %s93, %s95
      %p102 = scmp.eq.s32.totalorder %s22, 1
      %p103 = por %p101, %p102
      %p104 = scmp.ne.s32.totalorder %s95, %s96
      %p105 = scmp.eq.s32.totalorder %s22, 0
      %p106 = por %p104, %p105
      %p107 = scmp.ne.s32.totalorder %s95, %s96
      %p108 = scmp.eq.s32.totalorder %s23, 1
      %p109 = por %p107, %p108
      %p111 = scmp.ne.s32.totalorder %s96, %s110
      %p112 = scmp.eq.s32.totalorder %s23, 0
      %p113 = por %p111, %p112
      %s115 = sadd.s32 %s114, 1
      %p118 = scmp.eq.s32.totalorder %s17, 1
      %p119 = scmp.ne.s32.totalorder %s114, %s116
      %p120 = scmp.eq.s32.totalorder %s17, 0
      %p121 = por %p119, %p120
      %p122 = scmp.ne.s32.totalorder %s114, %s116
      %p123 = scmp.eq.s32.totalorder %s22, 1
      %p124 = por %p122, %p123
      %p125 = scmp.ne.s32.totalorder %s116, %s117
      %p126 = scmp.eq.s32.totalorder %s22, 0
      %p127 = por %p125, %p126
      %p128 = scmp.ne.s32.totalorder %s116, %s117
      %p129 = scmp.eq.s32.totalorder %s23, 1
      %p130 = por %p128, %p129
      %p132 = scmp.ne.s32.totalorder %s117, %s131
      %p133 = scmp.eq.s32.totalorder %s23, 0
      %p134 = por %p132, %p133
      %s135 = ssub.s32 %s17, %s24
      %p136 = scmp.eq.s32.totalorder %s135, 0
      %s138 = sadd.s32 %s137, 1
      %s139 = scalar_select %p136, %s137, %s138
      %p142 = pneg %p136
      %p143 = scmp.eq.s32.totalorder %s17, 1
      %p144 = por %p142, %p143
      %p145 = scmp.ne.s32.totalorder %s137, %s140
      %p146 = scmp.eq.s32.totalorder %s17, 0
      %p147 = por %p145, %p146
      %p148 = scmp.ne.s32.totalorder %s137, %s140
      %p149 = scmp.eq.s32.totalorder %s22, 1
      %p150 = por %p148, %p149
      %p151 = scmp.ne.s32.totalorder %s140, %s141
      %p152 = scmp.eq.s32.totalorder %s22, 0
      %p153 = por %p151, %p152
      %p154 = scmp.ne.s32.totalorder %s140, %s141
      %p155 = scmp.eq.s32.totalorder %s23, 1
      %p156 = por %p154, %p155
      %p158 = scmp.ne.s32.totalorder %s141, %s157
      %p159 = scmp.eq.s32.totalorder %s23, 0
      %p160 = por %p158, %p159
      %p161 = scmp.le.s32.totalorder 1, %s17
      %p162 = scmp.lt.s32.totalorder %s17, 3
      %p163 = pnand %p161, %p162
      %p164 = pneg %p163
      // Predicated region
      $region9: #{tpu_custom_call.1} parent=5 // pred_check
        _
      $region10: #{tpu_custom_call.1} parent=5 // pred_check_branch
        %166 = sbr.rel (%p163) target = $region12
      $region11: #{tpu_custom_call.1} parent=5 // pred_region
        %s167 = ssub.s32 %s17, 1
        // Predicated region
        $region13: #{tpu_custom_call.1} parent=11 // pred_check
          %p168 = pneg %p64
        $region14: #{tpu_custom_call.1} parent=11 // pred_check_branch
          %170 = sbr.rel (%p168) target = $region16
        $region15: #{tpu_custom_call.1} parent=11 // pred_region
          _
        $region16: #{tpu_custom_call.1} parent=11 // pred_fallthru
          _
        // Predicated region
        $region17: #{tpu_custom_call.1} parent=11 // pred_check
          %p171 = pneg %p85
        $region18: #{tpu_custom_call.1} parent=11 // pred_check_branch
          %173 = sbr.rel (%p171) target = $region20
        $region19: #{tpu_custom_call.1} parent=11 // pred_region
          _
        $region20: #{tpu_custom_call.1} parent=11 // pred_fallthru
          _
        // Predicated region
        $region21: #{tpu_custom_call.1} parent=11 // pred_check
          %p174 = pneg %p106
        $region22: #{tpu_custom_call.1} parent=11 // pred_check_branch
          %176 = sbr.rel (%p174) target = $region24
        $region23: #{tpu_custom_call.1} parent=11 // pred_region
          _
        $region24: #{tpu_custom_call.1} parent=11 // pred_fallthru
          _
        // Predicated region
        $region25: #{tpu_custom_call.1} parent=11 // pred_check
          %p177 = pneg %p127
        $region26: #{tpu_custom_call.1} parent=11 // pred_check_branch
          %179 = sbr.rel (%p177) target = $region28
        $region27: #{tpu_custom_call.1} parent=11 // pred_region
          _
        $region28: #{tpu_custom_call.1} parent=11 // pred_fallthru
          _
      $region12: #{tpu_custom_call.1} parent=5 // pred_fallthru
        _
      %p180 = scmp.lt.s32.totalorder %s17, 2
      // Predicated region
      $region29: #{tpu_custom_call.1} parent=5 // pred_check
        %p181 = pneg %p180
      $region30: #{tpu_custom_call.1} parent=5 // pred_check_branch
        %183 = sbr.rel (%p181) target = $region32
      $region31: #{tpu_custom_call.1} parent=5 // pred_region
        // Predicated region
        $region33: #{tpu_custom_call.1} parent=31 // pred_check
          %p184 = pneg %p37
        $region34: #{tpu_custom_call.1} parent=31 // pred_check_branch
          %186 = sbr.rel (%p184) target = $region36
        $region35: #{tpu_custom_call.1} parent=31 // pred_region
          %s187 = sand.u32 %s27, 1
          %s188 = scalar_lea.sflag [#allocation3], %s187
          %s189 = sand.u32 %s27, 1
          %s190 = smul.addr %s189, 256
          %s191 = scalar_lea.vmem [#allocation2], %s190
          %s192 = smul.u32 2, %s17
          %s194 = ssub.s32 4096, 4096
          %195 = vsyncadd %s188, %s194
          %s196 = smul.addr %s192, 16
          %s197 = smul.addr %s196, 128
          %s198 = scalar_lea.hbm %s0, %s197
          %s199 = sshll.u32 %s191, 4
          %s200 = int_to_ptr.vmem [resolvable:$true] %s199
          %205 = dma.hbm_to_vmem [thread:$0]  %s198, 4096, %s200, %s188, 256, 256, 16
        $region36: #{tpu_custom_call.1} parent=31 // pred_fallthru
          _
      $region32: #{tpu_custom_call.1} parent=5 // pred_fallthru
        _
      %p206 = scmp.le.s32.totalorder 1, %s17
      %p207 = scmp.lt.s32.totalorder %s17, 3
      %p208 = pnand %p206, %p207
      %p209 = pneg %p208
      // Predicated region
      $region37: #{tpu_custom_call.1} parent=5 // pred_check
        _
      $region38: #{tpu_custom_call.1} parent=5 // pred_check_branch
        %211 = sbr.rel (%p208) target = $region40
      $region39: #{tpu_custom_call.1} parent=5 // pred_region
        %s212 = ssub.s32 %s17, 1
        %s213 = sand.u32 %s30, 1
        %s214 = scalar_lea.sflag [#allocation3], %s213
        %s215 = sand.u32 %s30, 1
        %s216 = smul.addr %s215, 256
        %s217 = scalar_lea.vmem [#allocation2], %s216
        // Predicated region
        $region41: #{tpu_custom_call.1} parent=39 // pred_check
          %p218 = pneg %p43
        $region42: #{tpu_custom_call.1} parent=39 // pred_check_branch
          %220 = sbr.rel (%p218) target = $region44
        $region43: #{tpu_custom_call.1} parent=39 // pred_region
          %221 = dma.done %s214, 4096
        $region44: #{tpu_custom_call.1} parent=39 // pred_fallthru
          _
        %s222 = sand.u32 %s30, 1
        %s223 = scalar_lea.sflag [#allocation3], %s222
        %s224 = sand.u32 %s30, 1
        %s225 = smul.addr %s224, 256
        %s226 = scalar_lea.vmem [#allocation2], %s225
        %p227 = pneg %p43
        %p228 = pneg %p40
        %p229 = pneg %p64
        %p230 = pneg %p61
        %p231 = pneg %p85
        %p232 = pneg %p82
        %p233 = pneg %p106
        %p234 = pneg %p103
        %p235 = pneg %p127
        %p236 = pneg %p124
        %p237 = pneg %p153
        %p238 = pneg %p150
        %s239 = sand.u32 %s140, 1
        %s240 = scalar_lea.sflag [#allocation4], %s239
        %s241 = sand.u32 %s140, 1
        %s242 = smul.addr %s241, 256
        %s243 = scalar_lea.vmem [#allocation5], %s242
        %s244 = smul.u32 2, %s22
        %s245 = smul.u32 2, %s22
        %v246 = vld [vmem:[%s217] sm:$0xff]
        %v247 = vld [vmem:[%s217 + $0x8] sm:$0xff]
        %v248 = vld [vmem:[%s217 + $0x10] sm:$0xff]
        %v249 = vld [vmem:[%s217 + $0x18] sm:$0xff]
        %v250 = vld [vmem:[%s217 + $0x20] sm:$0xff]
        %v251 = vld [vmem:[%s217 + $0x28] sm:$0xff]
        %v252 = vld [vmem:[%s217 + $0x30] sm:$0xff]
        %v253 = vld [vmem:[%s217 + $0x38] sm:$0xff]
        %v254 = vld [vmem:[%s217 + $0x40] sm:$0xff]
        %v255 = vld [vmem:[%s217 + $0x48] sm:$0xff]
        %v256 = vld [vmem:[%s217 + $0x50] sm:$0xff]
        %v257 = vld [vmem:[%s217 + $0x58] sm:$0xff]
        %v258 = vld [vmem:[%s217 + $0x60] sm:$0xff]
        %v259 = vld [vmem:[%s217 + $0x68] sm:$0xff]
        %v260 = vld [vmem:[%s217 + $0x70] sm:$0xff]
        %v261 = vld [vmem:[%s217 + $0x78] sm:$0xff]
        %v262 = vld [vmem:[%s217 + $0x80] sm:$0xff]
        %v263 = vld [vmem:[%s217 + $0x88] sm:$0xff]
        %v264 = vld [vmem:[%s217 + $0x90] sm:$0xff]
        %v265 = vld [vmem:[%s217 + $0x98] sm:$0xff]
        %v266 = vld [vmem:[%s217 + $0xa0] sm:$0xff]
        %v267 = vld [vmem:[%s217 + $0xa8] sm:$0xff]
        %v268 = vld [vmem:[%s217 + $0xb0] sm:$0xff]
        %v269 = vld [vmem:[%s217 + $0xb8] sm:$0xff]
        %v270 = vld [vmem:[%s217 + $0xc0] sm:$0xff]
        %v271 = vld [vmem:[%s217 + $0xc8] sm:$0xff]
        %v272 = vld [vmem:[%s217 + $0xd0] sm:$0xff]
        %v273 = vld [vmem:[%s217 + $0xd8] sm:$0xff]
        %v274 = vld [vmem:[%s217 + $0xe0] sm:$0xff]
        %v275 = vld [vmem:[%s217 + $0xe8] sm:$0xff]
        %v276 = vld [vmem:[%s217 + $0xf0] sm:$0xff]
        %v277 = vld [vmem:[%s217 + $0xf8] sm:$0xff]
        %v278 = vadd.f32 %v246, %v247
        %279 = vadd.xlane.f32.xlu0 %v278
        %v280 = vpop.xlane.xlu0 %279
        %v281 = vadd.f32 %v248, %v249
        %282 = vadd.xlane.f32.xlu0 %v281
        %v283 = vpop.xlane.xlu0 %282
        %v284 = vadd.f32 %v250, %v251
        %285 = vadd.xlane.f32.xlu0 %v284
        %v286 = vpop.xlane.xlu0 %285
        %v287 = vadd.f32 %v252, %v253
        %288 = vadd.xlane.f32.xlu0 %v287
        %v289 = vpop.xlane.xlu0 %288
        %v290 = vadd.f32 %v254, %v255
        %291 = vadd.xlane.f32.xlu0 %v290
        %v292 = vpop.xlane.xlu0 %291
        %v293 = vadd.f32 %v256, %v257
        %294 = vadd.xlane.f32.xlu0 %v293
        %v295 = vpop.xlane.xlu0 %294
        %v296 = vadd.f32 %v258, %v259
        %297 = vadd.xlane.f32.xlu0 %v296
        %v298 = vpop.xlane.xlu0 %297
        %v299 = vadd.f32 %v260, %v261
        %300 = vadd.xlane.f32.xlu0 %v299
        %v301 = vpop.xlane.xlu0 %300
        %v302 = vadd.f32 %v262, %v263
        %303 = vadd.xlane.f32.xlu0 %v302
        %v304 = vpop.xlane.xlu0 %303
        %v305 = vadd.f32 %v264, %v265
        %306 = vadd.xlane.f32.xlu0 %v305
        %v307 = vpop.xlane.xlu0 %306
        %v308 = vadd.f32 %v266, %v267
        %309 = vadd.xlane.f32.xlu0 %v308
        %v310 = vpop.xlane.xlu0 %309
        %v311 = vadd.f32 %v268, %v269
        %312 = vadd.xlane.f32.xlu0 %v311
        %v313 = vpop.xlane.xlu0 %312
        %v314 = vadd.f32 %v270, %v271
        %315 = vadd.xlane.f32.xlu0 %v314
        %v316 = vpop.xlane.xlu0 %315
        %v317 = vadd.f32 %v272, %v273
        %318 = vadd.xlane.f32.xlu0 %v317
        %v319 = vpop.xlane.xlu0 %318
        %v320 = vadd.f32 %v274, %v275
        %321 = vadd.xlane.f32.xlu0 %v320
        %v322 = vpop.xlane.xlu0 %321
        %v323 = vadd.f32 %v276, %v277
        %324 = vadd.xlane.f32.xlu0 %v323
        %v325 = vpop.xlane.xlu0 %324
        %v326 = vrcp.pop 256.0
        %v327 = vmul.f32 %v280, %v326
        %v328 = vmul.f32 %v283, %v326
        %v329 = vmul.f32 %v286, %v326
        %v330 = vmul.f32 %v289, %v326
        %v331 = vmul.f32 %v292, %v326
        %v332 = vmul.f32 %v295, %v326
        %v333 = vmul.f32 %v298, %v326
        %v334 = vmul.f32 %v301, %v326
        %v335 = vmul.f32 %v304, %v326
        %v336 = vmul.f32 %v307, %v326
        %v337 = vmul.f32 %v310, %v326
        %v338 = vmul.f32 %v313, %v326
        %v339 = vmul.f32 %v316, %v326
        %v340 = vmul.f32 %v319, %v326
        %v341 = vmul.f32 %v322, %v326
        %v342 = vmul.f32 %v325, %v326
        %v343 = vld [vmem:[%s1] sm:$0xff]
        %v344 = vld [vmem:[%s1 + $0x8] sm:$0xff]
        %v345 = vld [vmem:[%s1 + $0x10] sm:$0xff]
        %v346 = vld [vmem:[%s1 + $0x18] sm:$0xff]
        %v347 = vld [vmem:[%s1 + $0x20] sm:$0xff]
        %v348 = vld [vmem:[%s1 + $0x28] sm:$0xff]
        %v349 = vld [vmem:[%s1 + $0x30] sm:$0xff]
        %v350 = vld [vmem:[%s1 + $0x38] sm:$0xff]
        %v351 = vld [vmem:[%s2] sm:$0x1]
        %v353 = vlaneseq
        %v354 = vshrl.u32 %v353, 7
        %v355 = vsub.s32 0, %v354
        %v356 = vrot.slane %v351, %v355
        %v374 = vlaneseq
        %v375 = vand.u32 %v374, 127
        %v376 = vlaneseq
        %v377 = vshrl.u32 %v376, 7
        %v378 = vsub.s32 %v375, %v377
        %v379 = vrot.slane %v327, %v378
        %v380 = vadd.s32 %v375, 4294967288
        %v381 = vlaneseq
        %v382 = vshrl.u32 %v381, 7
        %v383 = vsub.s32 %v380, %v382
        %v384 = vrot.slane %v328, %v383
        %vm385 = vcmask 130112
        %v386 = vsel %vm385, %v384, %v379
        %v387 = vadd.s32 %v375, 4294967280
        %v388 = vlaneseq
        %v389 = vshrl.u32 %v388, 7
        %v390 = vsub.s32 %v387, %v389
        %v391 = vrot.slane %v329, %v390
        %vm392 = vcmask 195712
        %v393 = vsel %vm392, %v391, %v386
        %v394 = vadd.s32 %v375, 4294967272
        %v395 = vlaneseq
        %v396 = vshrl.u32 %v395, 7
        %v397 = vsub.s32 %v394, %v396
        %v398 = vrot.slane %v330, %v397
        %vm399 = vcmask 261312
        %v400 = vsel %vm399, %v398, %v393
        %v401 = vadd.s32 %v375, 4294967264
        %v402 = vlaneseq
        %v403 = vshrl.u32 %v402, 7
        %v404 = vsub.s32 %v401, %v403
        %v405 = vrot.slane %v331, %v404
        %vm406 = vcmask 326912
        %v407 = vsel %vm406, %v405, %v400
        %v408 = vadd.s32 %v375, 4294967256
        %v409 = vlaneseq
        %v410 = vshrl.u32 %v409, 7
        %v411 = vsub.s32 %v408, %v410
        %v412 = vrot.slane %v332, %v411
        %vm413 = vcmask 392512
        %v414 = vsel %vm413, %v412, %v407
        %v415 = vadd.s32 %v375, 4294967248
        %v416 = vlaneseq
        %v417 = vshrl.u32 %v416, 7
        %v418 = vsub.s32 %v415, %v417
        %v419 = vrot.slane %v333, %v418
        %vm420 = vcmask 458112
        %v421 = vsel %vm420, %v419, %v414
        %v422 = vadd.s32 %v375, 4294967240
        %v423 = vlaneseq
        %v424 = vshrl.u32 %v423, 7
        %v425 = vsub.s32 %v422, %v424
        %v426 = vrot.slane %v334, %v425
        %vm427 = vcmask 523712
        %v428 = vsel %vm427, %v426, %v421
        %v429 = vlaneseq
        %v430 = vshrl.u32 %v429, 7
        %v431 = vsub.s32 %v375, %v430
        %v432 = vrot.slane %v335, %v431
        %v433 = vlaneseq
        %v434 = vshrl.u32 %v433, 7
        %v435 = vsub.s32 %v380, %v434
        %v436 = vrot.slane %v336, %v435
        %v437 = vsel %vm385, %v436, %v432
        %v438 = vlaneseq
        %v439 = vshrl.u32 %v438, 7
        %v440 = vsub.s32 %v387, %v439
        %v441 = vrot.slane %v337, %v440
        %v442 = vsel %vm392, %v441, %v437
        %v443 = vlaneseq
        %v444 = vshrl.u32 %v443, 7
        %v445 = vsub.s32 %v394, %v444
        %v446 = vrot.slane %v338, %v445
        %v447 = vsel %vm399, %v446, %v442
        %v448 = vlaneseq
        %v449 = vshrl.u32 %v448, 7
        %v450 = vsub.s32 %v401, %v449
        %v451 = vrot.slane %v339, %v450
        %v452 = vsel %vm406, %v451, %v447
        %v453 = vlaneseq
        %v454 = vshrl.u32 %v453, 7
        %v455 = vsub.s32 %v408, %v454
        %v456 = vrot.slane %v340, %v455
        %v457 = vsel %vm413, %v456, %v452
        %v458 = vlaneseq
        %v459 = vshrl.u32 %v458, 7
        %v460 = vsub.s32 %v415, %v459
        %v461 = vrot.slane %v341, %v460
        %v462 = vsel %vm420, %v461, %v457
        %v463 = vlaneseq
        %v464 = vshrl.u32 %v463, 7
        %v465 = vsub.s32 %v422, %v464
        %v466 = vrot.slane %v342, %v465
        %v467 = vsel %vm427, %v466, %v462
        %vm468 = vcmask 1041409
        %v469 = vsel %vm468, %v467, %v428
        %vm470 = vcmask 523264
        %v471 = vsel %vm470, %v469, 0
        %473 = vmatprep.subr.mxu0 0.0
        %474 = vmatpush1.msra.mxu0 %v343
        %475 = vmatprep.subr.mxu0 0.0
        %476 = vmatpush1.msra.mxu0 %v344
        %477 = vmatprep.subr.mxu0 0.0
        %478 = vmatpush1.msra.mxu0 %v345
        %479 = vmatprep.subr.mxu0 0.0
        %480 = vmatpush1.msra.mxu0 %v346
        %481 = vmatprep.subr.mxu0 0.0
        %482 = vmatpush1.msra.mxu0 %v347
        %483 = vmatprep.subr.mxu0 0.0
        %484 = vmatpush1.msra.mxu0 %v348
        %485 = vmatprep.subr.mxu0 0.0
        %486 = vmatpush1.msra.mxu0 %v349
        %487 = vmatprep.subr.mxu0 0.0
        %488 = vmatpush1.msra.mxu0 %v350
        %489 = vmatprep.subr.mxu0 0.0
        %490 = vmatpush1.msra.mxu0 0.0
        %491 = vmatprep.subr.mxu0 0.0
        %492 = vmatpush1.msra.mxu0 0.0
        %493 = vmatprep.subr.mxu0 0.0
        %494 = vmatpush1.msra.mxu0 0.0
        %495 = vmatprep.subr.mxu0 0.0
        %496 = vmatpush1.msra.mxu0 0.0
        %497 = vmatprep.subr.mxu0 0.0
        %498 = vmatpush1.msra.mxu0 0.0
        %499 = vmatprep.subr.mxu0 0.0
        %500 = vmatpush1.msra.mxu0 0.0
        %501 = vmatprep.subr.mxu0 0.0
        %502 = vmatpush1.msra.mxu0 0.0
        %503 = vmatprep.subr.mxu0 0.0
        %504 = vmatpush1.msra.mxu0 0.0
        %505 = vmatprep.subr.mxu0 0.0
        %506 = vmatpush1.msra.mxu0 0.0
        %507 = vmatprep.subr.mxu0 0.0
        %508 = vmatpush1.msra.mxu0 0.0
        %509 = vmatprep.subr.mxu0 0.0
        %510 = vmatpush1.msra.mxu0 0.0
        %511 = vmatprep.subr.mxu0 0.0
        %512 = vmatpush1.msra.mxu0 0.0
        %513 = vmatprep.subr.mxu0 0.0
        %514 = vmatpush1.msra.mxu0 0.0
        %515 = vmatprep.subr.mxu0 0.0
        %516 = vmatpush1.msra.mxu0 0.0
        %517 = vmatprep.subr.mxu0 0.0
        %518 = vmatpush1.msra.mxu0 0.0
        %519 = vmatprep.subr.mxu0 0.0
        %520 = vmatpush1.msra.mxu0 0.0
        %521 = vmatprep.subr.mxu0 0.0
        %522 = vmatpush1.msra.mxu0 0.0
        %523 = vmatprep.subr.mxu0 0.0
        %524 = vmatpush1.msra.mxu0 0.0
        %525 = vmatprep.subr.mxu0 0.0
        %526 = vmatpush1.msra.mxu0 0.0
        %527 = vmatprep.subr.mxu0 0.0
        %528 = vmatpush1.msra.mxu0 0.0
        %529 = vmatprep.subr.mxu0 0.0
        %530 = vmatpush1.msra.mxu0 0.0
        %531 = vmatprep.subr.mxu0 0.0
        %532 = vmatpush1.msra.mxu0 0.0
        %533 = vmatprep.subr.mxu0 0.0
        %534 = vmatpush1.msra.mxu0 0.0
        %535 = vmatprep.subr.mxu0 0.0
        %536 = vmatpush1.msra.mxu0 0.0
        %537 = vmatprep.mubr.f32.mxu0 0.0
        %538 = vmatmul.mubr.f32.gmra.mrb[0].mxu0 %v471
        %v539 = vpop.f32.mrb[0].mxu0
        %v540 = vadd.f32 %v356, %v539
        %v541 = vpop.f32.mrb[0].mxu0
        %542 = vdwg.mxu0
        %v543 = vmax.f32 %v540, 0.0
        %v544 = vld [vmem:[%s3] sm:$0xf]
        %v545 = vld [vmem:[%s4] sm:$0x1]
        %v547 = vlaneseq
        %v548 = vshrl.u32 %v547, 7
        %v549 = vsub.s32 0, %v548
        %v550 = vrot.slane %v545, %v549
        %vm552 = vcmask 31744
        %v554 = vsel %vm552, %v543, 0
        %vm556 = vcmask 1043456
        %v558 = vsel %vm556, %v544, 0
        %560 = vmatprep.subr.mxu0 0.0
        %561 = vmatpush1.msra.mxu0 %v558
        %562 = vmatprep.subr.mxu0 0.0
        %563 = vmatpush1.msra.mxu0 0.0
        %564 = vmatprep.subr.mxu0 0.0
        %565 = vmatpush1.msra.mxu0 0.0
        %566 = vmatprep.subr.mxu0 0.0
        %567 = vmatpush1.msra.mxu0 0.0
        %568 = vmatprep.subr.mxu0 0.0
        %569 = vmatpush1.msra.mxu0 0.0
        %570 = vmatprep.subr.mxu0 0.0
        %571 = vmatpush1.msra.mxu0 0.0
        %572 = vmatprep.subr.mxu0 0.0
        %573 = vmatpush1.msra.mxu0 0.0
        %574 = vmatprep.subr.mxu0 0.0
        %575 = vmatpush1.msra.mxu0 0.0
        %576 = vmatprep.subr.mxu0 0.0
        %577 = vmatpush1.msra.mxu0 0.0
        %578 = vmatprep.subr.mxu0 0.0
        %579 = vmatpush1.msra.mxu0 0.0
        %580 = vmatprep.subr.mxu0 0.0
        %581 = vmatpush1.msra.mxu0 0.0
        %582 = vmatprep.subr.mxu0 0.0
        %583 = vmatpush1.msra.mxu0 0.0
        %584 = vmatprep.subr.mxu0 0.0
        %585 = vmatpush1.msra.mxu0 0.0
        %586 = vmatprep.subr.mxu0 0.0
        %587 = vmatpush1.msra.mxu0 0.0
        %588 = vmatprep.subr.mxu0 0.0
        %589 = vmatpush1.msra.mxu0 0.0
        %590 = vmatprep.subr.mxu0 0.0
        %591 = vmatpush1.msra.mxu0 0.0
        %592 = vmatprep.subr.mxu0 0.0
        %593 = vmatpush1.msra.mxu0 0.0
        %594 = vmatprep.subr.mxu0 0.0
        %595 = vmatpush1.msra.mxu0 0.0
        %596 = vmatprep.subr.mxu0 0.0
        %597 = vmatpush1.msra.mxu0 0.0
        %598 = vmatprep.subr.mxu0 0.0
        %599 = vmatpush1.msra.mxu0 0.0
        %600 = vmatprep.subr.mxu0 0.0
        %601 = vmatpush1.msra.mxu0 0.0
        %602 = vmatprep.subr.mxu0 0.0
        %603 = vmatpush1.msra.mxu0 0.0
        %604 = vmatprep.subr.mxu0 0.0
        %605 = vmatpush1.msra.mxu0 0.0
        %606 = vmatprep.subr.mxu0 0.0
        %607 = vmatpush1.msra.mxu0 0.0
        %608 = vmatprep.subr.mxu0 0.0
        %609 = vmatpush1.msra.mxu0 0.0
        %610 = vmatprep.subr.mxu0 0.0
        %611 = vmatpush1.msra.mxu0 0.0
        %612 = vmatprep.subr.mxu0 0.0
        %613 = vmatpush1.msra.mxu0 0.0
        %614 = vmatprep.subr.mxu0 0.0
        %615 = vmatpush1.msra.mxu0 0.0
        %616 = vmatprep.subr.mxu0 0.0
        %617 = vmatpush1.msra.mxu0 0.0
        %618 = vmatprep.subr.mxu0 0.0
        %619 = vmatpush1.msra.mxu0 0.0
        %620 = vmatprep.subr.mxu0 0.0
        %621 = vmatpush1.msra.mxu0 0.0
        %622 = vmatprep.subr.mxu0 0.0
        %623 = vmatpush1.msra.mxu0 0.0
        %624 = vmatprep.mubr.f32.mxu0 0.0
        %625 = vmatmul.mubr.f32.gmra.mrb[0].mxu0 %v554
        %v626 = vpop.f32.mrb[0].mxu0
        %v627 = vadd.f32 %v550, %v626
        %v628 = vpop.f32.mrb[0].mxu0
        %629 = vdwg.mxu0
        %v630 = vxor.u32 %v627, 2147483648
        %v631 = vmul.f32 %v630, 1.442695
        %v632 = vpow.pop %v631
        %v633 = vadd.f32 %v632, 1.0
        %v634 = vrcp.pop %v633
        %v635 = vmul.f32 1.0, %v634
        %v636 = vlaneseq
        %v637 = vshrl.u32 %v636, 7
        %v638 = vsub.s32 0, %v637
        %v639 = vrot.slane %v635, %v638
        %641 = vbcast.lane.b32.xlu0 %v639, 256
        %v642 = vpop.permute.xlu0 %641
        %s644 = sor.u32 256, 8
        %645 = vbcast.lane.b32.xlu0 %v639, %s644
        %v646 = vpop.permute.xlu0 %645
        %s648 = sor.u32 256, 16
        %649 = vbcast.lane.b32.xlu0 %v639, %s648
        %v650 = vpop.permute.xlu0 %649
        %s652 = sor.u32 256, 24
        %653 = vbcast.lane.b32.xlu0 %v639, %s652
        %v654 = vpop.permute.xlu0 %653
        %s656 = sor.u32 256, 32
        %657 = vbcast.lane.b32.xlu0 %v639, %s656
        %v658 = vpop.permute.xlu0 %657
        %s660 = sor.u32 256, 40
        %661 = vbcast.lane.b32.xlu0 %v639, %s660
        %v662 = vpop.permute.xlu0 %661
        %s664 = sor.u32 256, 48
        %665 = vbcast.lane.b32.xlu0 %v639, %s664
        %v666 = vpop.permute.xlu0 %665
        %s668 = sor.u32 256, 56
        %669 = vbcast.lane.b32.xlu0 %v639, %s668
        %v670 = vpop.permute.xlu0 %669
        %v671 = vlaneseq
        %v672 = vshrl.u32 %v671, 7
        %v673 = vsub.s32 1, %v672
        %v674 = vrot.slane %v635, %v673
        %676 = vbcast.lane.b32.xlu0 %v674, 256
        %v677 = vpop.permute.xlu0 %676
        %s679 = sor.u32 256, 8
        %680 = vbcast.lane.b32.xlu0 %v674, %s679
        %v681 = vpop.permute.xlu0 %680
        %s683 = sor.u32 256, 16
        %684 = vbcast.lane.b32.xlu0 %v674, %s683
        %v685 = vpop.permute.xlu0 %684
        %s687 = sor.u32 256, 24
        %688 = vbcast.lane.b32.xlu0 %v674, %s687
        %v689 = vpop.permute.xlu0 %688
        %s691 = sor.u32 256, 32
        %692 = vbcast.lane.b32.xlu0 %v674, %s691
        %v693 = vpop.permute.xlu0 %692
        %s695 = sor.u32 256, 40
        %696 = vbcast.lane.b32.xlu0 %v674, %s695
        %v697 = vpop.permute.xlu0 %696
        %s699 = sor.u32 256, 48
        %700 = vbcast.lane.b32.xlu0 %v674, %s699
        %v701 = vpop.permute.xlu0 %700
        %s703 = sor.u32 256, 56
        %704 = vbcast.lane.b32.xlu0 %v674, %s703
        %v705 = vpop.permute.xlu0 %704
        %v706 = vmul.f32 %v246, %v642
        %v707 = vmul.f32 %v247, %v642
        %v708 = vmul.f32 %v248, %v646
        %v709 = vmul.f32 %v249, %v646
        %v710 = vmul.f32 %v250, %v650
        %v711 = vmul.f32 %v251, %v650
        %v712 = vmul.f32 %v252, %v654
        %v713 = vmul.f32 %v253, %v654
        %v714 = vmul.f32 %v254, %v658
        %v715 = vmul.f32 %v255, %v658
        %v716 = vmul.f32 %v256, %v662
        %v717 = vmul.f32 %v257, %v662
        %v718 = vmul.f32 %v258, %v666
        %v719 = vmul.f32 %v259, %v666
        %v720 = vmul.f32 %v260, %v670
        %v721 = vmul.f32 %v261, %v670
        %v722 = vmul.f32 %v262, %v677
        %v723 = vmul.f32 %v263, %v677
        %v724 = vmul.f32 %v264, %v681
        %v725 = vmul.f32 %v265, %v681
        %v726 = vmul.f32 %v266, %v685
        %v727 = vmul.f32 %v267, %v685
        %v728 = vmul.f32 %v268, %v689
        %v729 = vmul.f32 %v269, %v689
        %v730 = vmul.f32 %v270, %v693
        %v731 = vmul.f32 %v271, %v693
        %v732 = vmul.f32 %v272, %v697
        %v733 = vmul.f32 %v273, %v697
        %v734 = vmul.f32 %v274, %v701
        %v735 = vmul.f32 %v275, %v701
        %v736 = vmul.f32 %v276, %v705
        %v737 = vmul.f32 %v277, %v705
        %738 = vst [vmem:[%s243] sm:$0xff] %v706
        %739 = vst [vmem:[%s243 + $0x8] sm:$0xff] %v707
        %740 = vst [vmem:[%s243 + $0x10] sm:$0xff] %v708
        %741 = vst [vmem:[%s243 + $0x18] sm:$0xff] %v709
        %742 = vst [vmem:[%s243 + $0x20] sm:$0xff] %v710
        %743 = vst [vmem:[%s243 + $0x28] sm:$0xff] %v711
        %744 = vst [vmem:[%s243 + $0x30] sm:$0xff] %v712
        %745 = vst [vmem:[%s243 + $0x38] sm:$0xff] %v713
        %746 = vst [vmem:[%s243 + $0x40] sm:$0xff] %v714
        %747 = vst [vmem:[%s243 + $0x48] sm:$0xff] %v715
        %748 = vst [vmem:[%s243 + $0x50] sm:$0xff] %v716
        %749 = vst [vmem:[%s243 + $0x58] sm:$0xff] %v717
        %750 = vst [vmem:[%s243 + $0x60] sm:$0xff] %v718
        %751 = vst [vmem:[%s243 + $0x68] sm:$0xff] %v719
        %752 = vst [vmem:[%s243 + $0x70] sm:$0xff] %v720
        %753 = vst [vmem:[%s243 + $0x78] sm:$0xff] %v721
        %754 = vst [vmem:[%s243 + $0x80] sm:$0xff] %v722
        %755 = vst [vmem:[%s243 + $0x88] sm:$0xff] %v723
        %756 = vst [vmem:[%s243 + $0x90] sm:$0xff] %v724
        %757 = vst [vmem:[%s243 + $0x98] sm:$0xff] %v725
        %758 = vst [vmem:[%s243 + $0xa0] sm:$0xff] %v726
        %759 = vst [vmem:[%s243 + $0xa8] sm:$0xff] %v727
        %760 = vst [vmem:[%s243 + $0xb0] sm:$0xff] %v728
        %761 = vst [vmem:[%s243 + $0xb8] sm:$0xff] %v729
        %762 = vst [vmem:[%s243 + $0xc0] sm:$0xff] %v730
        %763 = vst [vmem:[%s243 + $0xc8] sm:$0xff] %v731
        %764 = vst [vmem:[%s243 + $0xd0] sm:$0xff] %v732
        %765 = vst [vmem:[%s243 + $0xd8] sm:$0xff] %v733
        %766 = vst [vmem:[%s243 + $0xe0] sm:$0xff] %v734
        %767 = vst [vmem:[%s243 + $0xe8] sm:$0xff] %v735
        %768 = vst [vmem:[%s243 + $0xf0] sm:$0xff] %v736
        %769 = vst [vmem:[%s243 + $0xf8] sm:$0xff] %v737
        %s770 = sand.u32 %s140, 1
        %s771 = scalar_lea.sflag [#allocation4], %s770
        %s772 = sand.u32 %s140, 1
        %s773 = smul.addr %s772, 256
        %s774 = scalar_lea.vmem [#allocation5], %s773
        // Predicated region
        $region45: #{tpu_custom_call.1} parent=39 // pred_check
          %p775 = pneg %p150
        $region46: #{tpu_custom_call.1} parent=39 // pred_check_branch
          %777 = sbr.rel (%p775) target = $region48
        $region47: #{tpu_custom_call.1} parent=39 // pred_region
          %s778 = smul.u32 2, %s22
          %s780 = ssub.s32 4096, 4096
          %781 = vsyncadd %s771, %s780
          %s782 = smul.addr %s778, 16
          %s783 = smul.addr %s782, 128
          %s784 = scalar_lea.hbm %s5, %s783
          %s785 = sshll.u32 %s774, 4
          %s786 = int_to_ptr.vmem [resolvable:$true] %s785
          %791 = dma.vmem_to_hbm [thread:$0]  %s786, 4096, %s784, %s771, 256, 256, 16
        $region48: #{tpu_custom_call.1} parent=39 // pred_fallthru
          _
      $region40: #{tpu_custom_call.1} parent=5 // pred_fallthru
        _
      %p792 = scmp.le.s32.totalorder 2, %s17
      // Predicated region
      $region49: #{tpu_custom_call.1} parent=5 // pred_check
        %p793 = pneg %p792
      $region50: #{tpu_custom_call.1} parent=5 // pred_check_branch
        %795 = sbr.rel (%p793) target = $region52
      $region51: #{tpu_custom_call.1} parent=5 // pred_region
        %s796 = ssub.s32 %s17, 2
        // Predicated region
        $region53: #{tpu_custom_call.1} parent=51 // pred_check
          %p797 = pneg %p156
        $region54: #{tpu_custom_call.1} parent=51 // pred_check_branch
          %799 = sbr.rel (%p797) target = $region56
        $region55: #{tpu_custom_call.1} parent=51 // pred_region
          %s800 = sand.u32 %s141, 1
          %s801 = scalar_lea.sflag [#allocation4], %s800
          %s802 = sand.u32 %s141, 1
          %s803 = smul.addr %s802, 256
          %s804 = scalar_lea.vmem [#allocation5], %s803
          %805 = dma.done %s801, 4096
        $region56: #{tpu_custom_call.1} parent=51 // pred_fallthru
          _
      $region52: #{tpu_custom_call.1} parent=5 // pred_fallthru
        _
    $region6: #{tpu_custom_call.1} parent=1 // loop_footer
      %s21 = sadd.s32 1, %s17
    $region7: #{tpu_custom_call.1} parent=1 // loop_footer_branch
      %16 = sbr.rel target = $region3
    $region8: #{tpu_custom_call.1} parent=1 // loop_exit
      _
    %806 = vsyncpa [#allocation3], 1
    %s807 = scalar_lea.sflag [#allocation3], 1
    %808 = vsyncpa %s807, 1
    %809 = vsyncpa [#allocation4], 1
    %s810 = scalar_lea.sflag [#allocation4], 1
    %811 = vsyncpa %s810, 1

</llo_original>
